<compile_context>
chip_gen: v7x
topology: tpu7x:2x2x1
jax: 0.10.0
libtpu: 0.0.40
codegen_flags: <defaults>
</compile_context>

<pallas_src>
import functools

import jax
import jax.numpy as jnp
from jax.experimental import pallas as pl
from jax.experimental.pallas import tpu as pltpu


def _round_up(x, m):
    return (x + m - 1) // m * m


def _gat_kernel(x_ref, adj_ref, w1c_ref, w2c_ref, out_ref, g1c_ref, g2c_ref,
                *, n_heads, d1, n_hidden, out_p, tm, neg_slope):
    f32 = jnp.float32
    bf16 = jnp.bfloat16
    phase = pl.program_id(0)
    tile = pl.program_id(1)
    row0 = pl.multiple_of(tile * tm, tm)

    adj = adj_ref[...]                       # (TM, NP) bf16 0/1 row tile
    no_edge = adj == 0                       # computed once, reused by every head

    def attention(el, er_t, g_full_bf, n_h, d_h):
        """out[i] = sum_j softmax_j(masked leaky(el[i]+er[j])) * g[j], per head."""
        outs = []
        for hh in range(n_h):
            z = el[:, hh:hh + 1] + er_t[hh:hh + 1, :]            # (TM, NP)
            z = jnp.maximum(z, neg_slope * z)                    # LeakyReLU (slope < 1)
            z = jnp.where(no_edge, f32(-1e9), z)                 # exact masked_fill
            z = z - jnp.max(z, axis=1, keepdims=True)            # torch-softmax parity
            p = jnp.exp(z)
            inv = pl.reciprocal(jnp.sum(p, axis=1, keepdims=True), approx=True)
            a = p * inv
            outs.append(jnp.dot(a.astype(bf16),
                                g_full_bf[:, hh * d_h:(hh + 1) * d_h],
                                preferred_element_type=f32))
        return outs[0] if n_h == 1 else jnp.concatenate(outs, axis=-1)

    # ---------------- phase 0: layer-1 attention + ELU + layer-2 projection -----
    @pl.when(phase == 0)
    def _layer1():
        # Whole-graph fused projection, once: x @ [W1 | W1@A1] = [g1 | el1 | er1].
        @pl.when(tile == 0)
        def _():
            g1c_ref[...] = jnp.dot(x_ref[...].astype(bf16), w1c_ref[...],
                                   preferred_element_type=f32)

        my = g1c_ref[pl.ds(row0, tm), :]                          # (TM, nh+2H)
        el1 = my[:, n_hidden:n_hidden + n_heads]                  # (TM, H)
        all1 = g1c_ref[...]                                       # (NP, nh+2H)
        er1_t = all1[:, n_hidden + n_heads:].T                    # (H, NP): one transpose
        g1_bf = all1[:, :n_hidden].astype(bf16)                   # (NP, nh)

        h1 = attention(el1, er1_t, g1_bf, n_heads, d1)            # (TM, nh)
        h1 = jnp.where(h1 > 0.0, h1, jnp.exp(h1) - 1.0)           # ELU(alpha=1)
        # Fused layer-2 projection: ELU(h1) @ [W2_pad | W2@A2] = [g2_pad | el2 | er2]
        g2c_ref[pl.ds(row0, tm), :] = jnp.dot(h1.astype(bf16), w2c_ref[...],
                                              preferred_element_type=f32)

    # ---------------- phase 1: layer-2 attention + isolated-row zeroing ---------
    @pl.when(phase == 1)
    def _layer2():
        my = g2c_ref[pl.ds(row0, tm), :]                          # (TM, out_p+2)
        el2 = my[:, out_p:out_p + 1]                              # (TM, 1)
        all2 = g2c_ref[...]                                       # (NP, out_p+2)
        er2_t = all2[:, out_p + 1:out_p + 2].T                    # (1, NP)
        g2_bf = all2[:, :out_p].astype(bf16)                      # (NP, out_p)

        out = attention(el2, er2_t, g2_bf, 1, out_p)              # (TM, out_p) lane-dense
        # Reference-module quirk (adj_x): zero the rows of isolated nodes.
        rowsum = jnp.sum(adj.astype(f32), axis=1, keepdims=True)
        out = jnp.where(rowsum == 0.0, 0.0, out)
        out_ref[...] = out.astype(out_ref.dtype)


def _pack_attn(a_src, a_dst, n_heads):
    """(D,) shared src/dst attention vectors -> (H*D, 2H) block-diagonal pack so
    that g_flat @ pack = [el_0..el_{H-1} | er_0..er_{H-1}]."""
    d = a_src.shape[0]
    eye = jnp.eye(n_heads, dtype=jnp.float32)
    src = (a_src.astype(jnp.float32)[None, :, None] * eye[:, None, :]
           ).reshape(n_heads * d, n_heads)
    dst = (a_dst.astype(jnp.float32)[None, :, None] * eye[:, None, :]
           ).reshape(n_heads * d, n_heads)
    return jnp.concatenate([src, dst], axis=1)                    # f32


def gat_forward(x, adj_mat, params, *, n_heads, row_tile=256):
    """x: (1, N, F_in) f32, adj_mat: (1, N, N) 0/1 -> (1, N, n_classes) f32."""
    h = x[0].astype(jnp.float32)                                  # squeeze(0)
    adj = adj_mat[0]
    n_nodes, f_in = h.shape
    n_hidden = params["w1"].shape[1]
    n_classes = params["w2"].shape[1]
    d1 = n_hidden // n_heads
    out_p = _round_up(n_classes, 128)                             # lane-dense output

    tm = min(row_tile, _round_up(n_nodes, 8))
    n_pad = _round_up(n_nodes, tm)
    n_tiles = n_pad // tm
    if n_pad != n_nodes:
        h = jnp.pad(h, ((0, n_pad - n_nodes), (0, 0)))
        adj = jnp.pad(adj, ((0, n_pad - n_nodes), (0, n_pad - n_nodes)))
    adj = adj.astype(jnp.bfloat16)                                # 0/1 exact, half DMA

    # Host-side weight fusion (compose in f32, cast to bf16 MXU operands).
    w1 = params["w1"].astype(jnp.float32)
    a1_pack = _pack_attn(params["a1_src"], params["a1_dst"], n_heads)
    w1c = jnp.concatenate([w1, w1 @ a1_pack], axis=1).astype(jnp.bfloat16)
    w2 = params["w2"].astype(jnp.float32)
    a2_pack = _pack_attn(params["a2_src"], params["a2_dst"], 1)
    w2_pad = jnp.pad(w2, ((0, 0), (0, out_p - n_classes)))        # padding folded into W2
    w2c = jnp.concatenate([w2_pad, w2 @ a2_pack], axis=1).astype(jnp.bfloat16)

    c1 = n_hidden + 2 * n_heads
    c2 = out_p + 2

    kernel = functools.partial(_gat_kernel, n_heads=n_heads, d1=d1,
                               n_hidden=n_hidden, out_p=out_p, tm=tm,
                               neg_slope=0.2)

    # Advisory VMEM budget and XLA cost estimate.
    est_vmem = (4 * n_pad * f_in + 2 * 2 * tm * n_pad * 2        # x + adj double-buffer
                + 2 * (w1c.size + w2c.size)
                + 4 * n_pad * (c1 + c2)                          # g1c/g2c scratch
                + 2 * 4 * tm * out_p                             # out double-buffer
                + 6 * 4 * tm * n_pad)                            # live f32 temporaries
    flops = (2 * n_pad * f_in * c1 + 2 * n_pad * n_hidden * c2
             + n_heads * (6 * n_pad * n_pad + 2 * n_pad * n_pad * d1)
             + 6 * n_pad * n_pad + 2 * n_pad * n_pad * out_p)
    transcendentals = (n_heads + 1) * n_pad * n_pad + n_pad * n_hidden
    bytes_accessed = (2 * 2 * n_pad * n_pad                      # adj bf16, two passes
                      + 4 * n_pad * f_in + 2 * (w1c.size + w2c.size)
                      + 4 * n_pad * out_p)

    out = pl.pallas_call(
        kernel,
        out_shape=jax.ShapeDtypeStruct((n_pad, out_p), jnp.float32),
        grid=(2, n_tiles),
        in_specs=[
            pl.BlockSpec((n_pad, f_in), lambda p, i: (0, 0)),     # x, resident
            pl.BlockSpec((tm, n_pad), lambda p, i: (i, 0)),       # adj row tile, streamed
            pl.BlockSpec((f_in, c1), lambda p, i: (0, 0)),        # fused W1, resident
            pl.BlockSpec((n_hidden, c2), lambda p, i: (0, 0)),    # fused W2, resident
        ],
        # phase 0 never touches the output; map it to block 0 so each HBM output
        # block is written back exactly once (during phase 1).
        out_specs=pl.BlockSpec((tm, out_p), lambda p, i: (i * p, 0)),
        scratch_shapes=[pltpu.VMEM((n_pad, c1), jnp.float32),     # [g1 | el1 | er1]
                        pltpu.VMEM((n_pad, c2), jnp.float32)],    # [g2_pad | el2 | er2]
        compiler_params=pltpu.CompilerParams(
            dimension_semantics=("arbitrary", "arbitrary"),       # phases are sequential
            vmem_limit_bytes=int(min(max(2 * est_vmem, 32 * 1024 * 1024),
                                     64 * 1024 * 1024))),
        cost_estimate=pl.CostEstimate(flops=int(flops),
                                      transcendentals=int(transcendentals),
                                      bytes_accessed=int(bytes_accessed)),
    )(h, adj, w1c, w2c)
    return out[:n_nodes, :n_classes][None]                        # unsqueeze(0)


def _reference(x, adj_mat, params, n_heads):
    """Pure-JAX mirror of the PyTorch module (eval mode) for validation."""
    h = x[0].astype(jnp.float32)
    adj = adj_mat[0].astype(jnp.float32)
    n = h.shape[0]

    def layer(hin, w, a_src, a_dst, heads):
        g = hin @ w
        d = g.shape[1] // heads
        g = g.reshape(n, heads, d)
        el = jnp.einsum("nhd,d->nh", g, a_src)
        er = jnp.einsum("nhd,d->nh", g, a_dst)
        e = el[:, None, :] + er[None, :, :]                       # (n, n, heads)
        e = jnp.where(e >= 0, e, 0.2 * e)
        e = jnp.where(adj[:, :, None] == 0, -1e9, e)
        a = jax.nn.softmax(e, axis=1)
        return jnp.einsum("ijh,jhf->ihf", a, g).reshape(n, -1)

    h1 = layer(h, params["w1"], params["a1_src"], params["a1_dst"], n_heads)
    h1 = jnp.where(h1 > 0, h1, jnp.expm1(h1))
    out = layer(h1, params["w2"], params["a2_src"], params["a2_dst"], 1)
    rowsum = adj.sum(axis=1, keepdims=True)
    out = jnp.where(rowsum == 0, 0.0, out)
    return out[None]


if __name__ == "__main__":
    # NOTE: the PyTorch masked_fill of adj_x (N, in_features) against the
    # (N, n_classes) output only broadcasts when in_features == n_classes.
    N, in_features, n_hidden, n_heads, n_classes = 8, 16, 32, 4, 16
    D1 = n_hidden // n_heads

    key = jax.random.PRNGKey(0)
    ks = jax.random.split(key, 8)

    x = jax.random.normal(ks[0], (1, N, in_features), jnp.float32)
    adj = (jax.random.uniform(ks[1], (1, N, N)) < 0.4).astype(jnp.float32)
    adj = adj.at[0].set(jnp.maximum(adj[0], jnp.eye(N, dtype=jnp.float32)))
    adj = adj.at[0, N - 1, :].set(0.0)  # isolated node exercises adj_x zeroing

    params = {
        "w1":     0.1 * jax.random.normal(ks[2], (in_features, n_hidden), jnp.float32),
        "a1_src": 0.1 * jax.random.normal(ks[3], (D1,), jnp.float32),
        "a1_dst": 0.1 * jax.random.normal(ks[4], (D1,), jnp.float32),
        "w2":     0.1 * jax.random.normal(ks[5], (n_hidden, n_classes), jnp.float32),
        "a2_src": 0.1 * jax.random.normal(ks[6], (n_classes,), jnp.float32),
        "a2_dst": 0.1 * jax.random.normal(ks[7], (n_classes,), jnp.float32),
    }

    y = gat_forward(x, adj, params, n_heads=n_heads)
    y = jax.block_until_ready(y)
    assert y.shape == (1, N, n_classes)
    assert bool(jnp.all(jnp.isfinite(y)))
    assert bool(jnp.all(y[0, N - 1] == 0.0))  # isolated node masked to zero

    y_ref = jax.block_until_ready(_reference(x, adj, params, n_heads))
    err = float(jnp.max(jnp.abs(y - y_ref)))
    assert err < 5e-2, f"max abs err vs reference: {err}"
    print("KERNEL_OK")
</pallas_src>

<mosaic_0001>
module attributes {stable_mosaic.version = 11 : i64} {
  func.func @_gat_kernel(%arg0: i32, %arg1: i32, %arg2: memref<8x16xf32, #tpu.memory_space<vmem>>, %arg3: memref<8x8xbf16, #tpu.memory_space<vmem>>, %arg4: memref<16x40xbf16, #tpu.memory_space<vmem>>, %arg5: memref<32x130xbf16, #tpu.memory_space<vmem>>, %arg6: memref<8x128xf32, #tpu.memory_space<vmem>>, %arg7: memref<8x40xf32, #tpu.memory_space<vmem>>, %arg8: memref<8x130xf32, #tpu.memory_space<vmem>>) attributes {dimension_semantics = [#tpu.dimension_semantics<arbitrary>, #tpu.dimension_semantics<arbitrary>], iteration_bounds = array<i64: 2, 1>, scalar_prefetch = 0 : i64, scratch_operands = 2 : i64, tpu.core_type = #tpu.core_type<tc>, window_params = [{pipeline_mode = #tpu.pipeline_mode<synchronous>, transform_indices = @transform_0, window_bounds = array<i64: 8, 16>}, {transform_indices = @transform_1, window_bounds = array<i64: 8, 8>}, {pipeline_mode = #tpu.pipeline_mode<synchronous>, transform_indices = @transform_2, window_bounds = array<i64: 16, 40>}, {pipeline_mode = #tpu.pipeline_mode<synchronous>, transform_indices = @transform_3, window_bounds = array<i64: 32, 130>}, {transform_indices = @transform_4, window_bounds = array<i64: 8, 128>}]} {
    %c8_i32 = arith.constant 8 : i32
    %0 = arith.muli %arg1, %c8_i32 : i32
    %1 = tpu.assume_multiple %0, 8 : i32
    %c0 = arith.constant 0 : index
    %c0_0 = arith.constant 0 : index
    %2 = vector.load %arg3[%c0, %c0_0] : memref<8x8xbf16, #tpu.memory_space<vmem>>, vector<8x8xbf16>
    %cst = arith.constant 0.000000e+00 : bf16
    %3 = vector.broadcast %cst : bf16 to vector<8x8xbf16>
    %4 = arith.cmpf oeq, %2, %3 : vector<8x8xbf16>
    %c0_i32 = arith.constant 0 : i32
    %5 = arith.cmpi eq, %arg0, %c0_i32 : i32
    %6 = arith.extui %5 : i1 to i32
    %c0_i32_1 = arith.constant 0 : i32
    %7 = arith.cmpi ne, %6, %c0_i32_1 : i32
    scf.if %7 {
      %c0_i32_3 = arith.constant 0 : i32
      %11 = arith.cmpi eq, %arg1, %c0_i32_3 : i32
      %12 = arith.extui %11 : i1 to i32
      %c0_i32_4 = arith.constant 0 : i32
      %13 = arith.cmpi ne, %12, %c0_i32_4 : i32
      scf.if %13 {
        %c0_34 = arith.constant 0 : index
        %c0_35 = arith.constant 0 : index
        %126 = vector.load %arg2[%c0_34, %c0_35] : memref<8x16xf32, #tpu.memory_space<vmem>>, vector<8x16xf32>
        %127 = arith.truncf %126 : vector<8x16xf32> to vector<8x16xbf16>
        %c0_36 = arith.constant 0 : index
        %c0_37 = arith.constant 0 : index
        %128 = vector.load %arg4[%c0_36, %c0_37] : memref<16x40xbf16, #tpu.memory_space<vmem>>, vector<16x40xbf16>
        %cst_38 = arith.constant dense<0.000000e+00> : vector<8x40xf32>
        %129 = tpu.matmul %127, %128, %cst_38 {dimension_numbers = #tpu.dot_dimension_numbers<[1], [0], [0], [1], [0, 0, 1, 1], [], []>} : vector<8x16xbf16>, vector<16x40xbf16>, vector<8x40xf32> -> vector<8x40xf32>
        %c0_39 = arith.constant 0 : index
        %c0_40 = arith.constant 0 : index
        %130 = vector.load %arg7[%c0_39, %c0_40] : memref<8x40xf32, #tpu.memory_space<vmem>>, vector<8x40xf32>
        tpu.vector_store %arg7[%c0_39, %c0_40], %129 {strides = array<i32>} : memref<8x40xf32, #tpu.memory_space<vmem>>, vector<8x40xf32>,
      } else {
      }
      %14 = arith.index_cast %1 : i32 to index
      %c0_5 = arith.constant 0 : index
      %15 = vector.load %arg7[%14, %c0_5] : memref<8x40xf32, #tpu.memory_space<vmem>>, vector<8x40xf32>
      %16 = vector.extract_strided_slice %15 {offsets = [0, 32], sizes = [8, 4], strides = [1, 1]} : vector<8x40xf32> to vector<8x4xf32>
      %c0_6 = arith.constant 0 : index
      %c0_7 = arith.constant 0 : index
      %17 = vector.load %arg7[%c0_6, %c0_7] : memref<8x40xf32, #tpu.memory_space<vmem>>, vector<8x40xf32>
      %18 = vector.extract_strided_slice %17 {offsets = [0, 36], sizes = [8, 4], strides = [1, 1]} : vector<8x40xf32> to vector<8x4xf32>
      %19 = tpu.transpose %18, [1, 0] : vector<8x4xf32> -> vector<4x8xf32>
      %20 = vector.extract_strided_slice %17 {offsets = [0, 0], sizes = [8, 32], strides = [1, 1]} : vector<8x40xf32> to vector<8x32xf32>
      %21 = arith.truncf %20 : vector<8x32xf32> to vector<8x32xbf16>
      %22 = vector.extract_strided_slice %16 {offsets = [0, 0], sizes = [8, 1], strides = [1, 1]} : vector<8x4xf32> to vector<8x1xf32>
      %23 = vector.extract_strided_slice %19 {offsets = [0, 0], sizes = [1, 8], strides = [1, 1]} : vector<4x8xf32> to vector<1x8xf32>
      %24 = vector.broadcast %22 : vector<8x1xf32> to vector<8x8xf32>
      %25 = vector.broadcast %23 : vector<1x8xf32> to vector<8x8xf32>
      %26 = arith.addf %24, %25 : vector<8x8xf32>
      %cst_8 = arith.constant 2.000000e-01 : f32
      %27 = vector.broadcast %cst_8 : f32 to vector<8x8xf32>
      %28 = arith.mulf %27, %26 : vector<8x8xf32>
      %29 = arith.maximumf %26, %28 : vector<8x8xf32>
      %cst_9 = arith.constant -1.000000e+09 : f32
      %30 = vector.broadcast %cst_9 : f32 to vector<8x8xf32>
      %31 = arith.select %4, %30, %29 : vector<8x8xi1>, vector<8x8xf32>
      %cst_10 = arith.constant dense<0xFF800000> : vector<8xf32>
      %32 = vector.multi_reduction <maximumf>, %31, %cst_10 [1] : vector<8x8xf32> to vector<8xf32>
      %33 = vector.shape_cast %32 : vector<8xf32> to vector<8x1xf32>
      %34 = vector.broadcast %33 : vector<8x1xf32> to vector<8x8xf32>
      %35 = arith.subf %31, %34 : vector<8x8xf32>
      %36 = math.exp %35 : vector<8x8xf32>
      %cst_11 = arith.constant dense<0.000000e+00> : vector<8xf32>
      %37 = vector.multi_reduction <add>, %36, %cst_11 [1] : vector<8x8xf32> to vector<8xf32>
      %38 = vector.shape_cast %37 : vector<8xf32> to vector<8x1xf32>
      %39 = tpu.reciprocal %38 {approx = true} : vector<8x1xf32> -> vector<8x1xf32>
      %40 = vector.broadcast %39 : vector<8x1xf32> to vector<8x8xf32>
      %41 = arith.mulf %36, %40 : vector<8x8xf32>
      %42 = arith.truncf %41 : vector<8x8xf32> to vector<8x8xbf16>
      %43 = vector.extract_strided_slice %21 {offsets = [0, 0], sizes = [8, 8], strides = [1, 1]} : vector<8x32xbf16> to vector<8x8xbf16>
      %cst_12 = arith.constant dense<0.000000e+00> : vector<8x8xf32>
      %44 = tpu.matmul %42, %43, %cst_12 {dimension_numbers = #tpu.dot_dimension_numbers<[1], [0], [0], [1], [0, 0, 1, 1], [], []>} : vector<8x8xbf16>, vector<8x8xbf16>, vector<8x8xf32> -> vector<8x8xf32>
      %45 = vector.extract_strided_slice %16 {offsets = [0, 1], sizes = [8, 1], strides = [1, 1]} : vector<8x4xf32> to vector<8x1xf32>
      %46 = vector.extract_strided_slice %19 {offsets = [1, 0], sizes = [1, 8], strides = [1, 1]} : vector<4x8xf32> to vector<1x8xf32>
      %47 = vector.broadcast %45 : vector<8x1xf32> to vector<8x8xf32>
      %48 = vector.broadcast %46 : vector<1x8xf32> to vector<8x8xf32>
      %49 = arith.addf %47, %48 : vector<8x8xf32>
      %cst_13 = arith.constant 2.000000e-01 : f32
      %50 = vector.broadcast %cst_13 : f32 to vector<8x8xf32>
      %51 = arith.mulf %50, %49 : vector<8x8xf32>
      %52 = arith.maximumf %49, %51 : vector<8x8xf32>
      %cst_14 = arith.constant -1.000000e+09 : f32
      %53 = vector.broadcast %cst_14 : f32 to vector<8x8xf32>
      %54 = arith.select %4, %53, %52 : vector<8x8xi1>, vector<8x8xf32>
      %cst_15 = arith.constant dense<0xFF800000> : vector<8xf32>
      %55 = vector.multi_reduction <maximumf>, %54, %cst_15 [1] : vector<8x8xf32> to vector<8xf32>
      %56 = vector.shape_cast %55 : vector<8xf32> to vector<8x1xf32>
      %57 = vector.broadcast %56 : vector<8x1xf32> to vector<8x8xf32>
      %58 = arith.subf %54, %57 : vector<8x8xf32>
      %59 = math.exp %58 : vector<8x8xf32>
      %cst_16 = arith.constant dense<0.000000e+00> : vector<8xf32>
      %60 = vector.multi_reduction <add>, %59, %cst_16 [1] : vector<8x8xf32> to vector<8xf32>
      %61 = vector.shape_cast %60 : vector<8xf32> to vector<8x1xf32>
      %62 = tpu.reciprocal %61 {approx = true} : vector<8x1xf32> -> vector<8x1xf32>
      %63 = vector.broadcast %62 : vector<8x1xf32> to vector<8x8xf32>
      %64 = arith.mulf %59, %63 : vector<8x8xf32>
      %65 = arith.truncf %64 : vector<8x8xf32> to vector<8x8xbf16>
      %66 = vector.extract_strided_slice %21 {offsets = [0, 8], sizes = [8, 8], strides = [1, 1]} : vector<8x32xbf16> to vector<8x8xbf16>
      %cst_17 = arith.constant dense<0.000000e+00> : vector<8x8xf32>
      %67 = tpu.matmul %65, %66, %cst_17 {dimension_numbers = #tpu.dot_dimension_numbers<[1], [0], [0], [1], [0, 0, 1, 1], [], []>} : vector<8x8xbf16>, vector<8x8xbf16>, vector<8x8xf32> -> vector<8x8xf32>
      %68 = vector.extract_strided_slice %16 {offsets = [0, 2], sizes = [8, 1], strides = [1, 1]} : vector<8x4xf32> to vector<8x1xf32>
      %69 = vector.extract_strided_slice %19 {offsets = [2, 0], sizes = [1, 8], strides = [1, 1]} : vector<4x8xf32> to vector<1x8xf32>
      %70 = vector.broadcast %68 : vector<8x1xf32> to vector<8x8xf32>
      %71 = vector.broadcast %69 : vector<1x8xf32> to vector<8x8xf32>
      %72 = arith.addf %70, %71 : vector<8x8xf32>
      %cst_18 = arith.constant 2.000000e-01 : f32
      %73 = vector.broadcast %cst_18 : f32 to vector<8x8xf32>
      %74 = arith.mulf %73, %72 : vector<8x8xf32>
      %75 = arith.maximumf %72, %74 : vector<8x8xf32>
      %cst_19 = arith.constant -1.000000e+09 : f32
      %76 = vector.broadcast %cst_19 : f32 to vector<8x8xf32>
      %77 = arith.select %4, %76, %75 : vector<8x8xi1>, vector<8x8xf32>
      %cst_20 = arith.constant dense<0xFF800000> : vector<8xf32>
      %78 = vector.multi_reduction <maximumf>, %77, %cst_20 [1] : vector<8x8xf32> to vector<8xf32>
      %79 = vector.shape_cast %78 : vector<8xf32> to vector<8x1xf32>
      %80 = vector.broadcast %79 : vector<8x1xf32> to vector<8x8xf32>
      %81 = arith.subf %77, %80 : vector<8x8xf32>
      %82 = math.exp %81 : vector<8x8xf32>
      %cst_21 = arith.constant dense<0.000000e+00> : vector<8xf32>
      %83 = vector.multi_reduction <add>, %82, %cst_21 [1] : vector<8x8xf32> to vector<8xf32>
      %84 = vector.shape_cast %83 : vector<8xf32> to vector<8x1xf32>
      %85 = tpu.reciprocal %84 {approx = true} : vector<8x1xf32> -> vector<8x1xf32>
      %86 = vector.broadcast %85 : vector<8x1xf32> to vector<8x8xf32>
      %87 = arith.mulf %82, %86 : vector<8x8xf32>
      %88 = arith.truncf %87 : vector<8x8xf32> to vector<8x8xbf16>
      %89 = vector.extract_strided_slice %21 {offsets = [0, 16], sizes = [8, 8], strides = [1, 1]} : vector<8x32xbf16> to vector<8x8xbf16>
      %cst_22 = arith.constant dense<0.000000e+00> : vector<8x8xf32>
      %90 = tpu.matmul %88, %89, %cst_22 {dimension_numbers = #tpu.dot_dimension_numbers<[1], [0], [0], [1], [0, 0, 1, 1], [], []>} : vector<8x8xbf16>, vector<8x8xbf16>, vector<8x8xf32> -> vector<8x8xf32>
      %91 = vector.extract_strided_slice %16 {offsets = [0, 3], sizes = [8, 1], strides = [1, 1]} : vector<8x4xf32> to vector<8x1xf32>
      %92 = vector.extract_strided_slice %19 {offsets = [3, 0], sizes = [1, 8], strides = [1, 1]} : vector<4x8xf32> to vector<1x8xf32>
      %93 = vector.broadcast %91 : vector<8x1xf32> to vector<8x8xf32>
      %94 = vector.broadcast %92 : vector<1x8xf32> to vector<8x8xf32>
      %95 = arith.addf %93, %94 : vector<8x8xf32>
      %cst_23 = arith.constant 2.000000e-01 : f32
      %96 = vector.broadcast %cst_23 : f32 to vector<8x8xf32>
      %97 = arith.mulf %96, %95 : vector<8x8xf32>
      %98 = arith.maximumf %95, %97 : vector<8x8xf32>
      %cst_24 = arith.constant -1.000000e+09 : f32
      %99 = vector.broadcast %cst_24 : f32 to vector<8x8xf32>
      %100 = arith.select %4, %99, %98 : vector<8x8xi1>, vector<8x8xf32>
      %cst_25 = arith.constant dense<0xFF800000> : vector<8xf32>
      %101 = vector.multi_reduction <maximumf>, %100, %cst_25 [1] : vector<8x8xf32> to vector<8xf32>
      %102 = vector.shape_cast %101 : vector<8xf32> to vector<8x1xf32>
      %103 = vector.broadcast %102 : vector<8x1xf32> to vector<8x8xf32>
      %104 = arith.subf %100, %103 : vector<8x8xf32>
      %105 = math.exp %104 : vector<8x8xf32>
      %cst_26 = arith.constant dense<0.000000e+00> : vector<8xf32>
      %106 = vector.multi_reduction <add>, %105, %cst_26 [1] : vector<8x8xf32> to vector<8xf32>
      %107 = vector.shape_cast %106 : vector<8xf32> to vector<8x1xf32>
      %108 = tpu.reciprocal %107 {approx = true} : vector<8x1xf32> -> vector<8x1xf32>
      %109 = vector.broadcast %108 : vector<8x1xf32> to vector<8x8xf32>
      %110 = arith.mulf %105, %109 : vector<8x8xf32>
      %111 = arith.truncf %110 : vector<8x8xf32> to vector<8x8xbf16>
      %112 = vector.extract_strided_slice %21 {offsets = [0, 24], sizes = [8, 8], strides = [1, 1]} : vector<8x32xbf16> to vector<8x8xbf16>
      %cst_27 = arith.constant dense<0.000000e+00> : vector<8x8xf32>
      %113 = tpu.matmul %111, %112, %cst_27 {dimension_numbers = #tpu.dot_dimension_numbers<[1], [0], [0], [1], [0, 0, 1, 1], [], []>} : vector<8x8xbf16>, vector<8x8xbf16>, vector<8x8xf32> -> vector<8x8xf32>
      %114 = tpu.concatenate %44, %67, %90, %113 in 1 : vector<8x8xf32>, vector<8x8xf32>, vector<8x8xf32>, vector<8x8xf32> -> vector<8x32xf32>
      %cst_28 = arith.constant 0.000000e+00 : f32
      %115 = vector.broadcast %cst_28 : f32 to vector<8x32xf32>
      %116 = arith.cmpf ogt, %114, %115 : vector<8x32xf32>
      %117 = math.exp %114 : vector<8x32xf32>
      %cst_29 = arith.constant 1.000000e+00 : f32
      %118 = vector.broadcast %cst_29 : f32 to vector<8x32xf32>
      %119 = arith.subf %117, %118 : vector<8x32xf32>
      %120 = arith.select %116, %114, %119 : vector<8x32xi1>, vector<8x32xf32>
      %121 = arith.truncf %120 : vector<8x32xf32> to vector<8x32xbf16>
      %c0_30 = arith.constant 0 : index
      %c0_31 = arith.constant 0 : index
      %122 = vector.load %arg5[%c0_30, %c0_31] : memref<32x130xbf16, #tpu.memory_space<vmem>>, vector<32x130xbf16>
      %cst_32 = arith.constant dense<0.000000e+00> : vector<8x130xf32>
      %123 = tpu.matmul %121, %122, %cst_32 {dimension_numbers = #tpu.dot_dimension_numbers<[1], [0], [0], [1], [0, 0, 1, 1], [], []>} : vector<8x32xbf16>, vector<32x130xbf16>, vector<8x130xf32> -> vector<8x130xf32>
      %124 = arith.index_cast %1 : i32 to index
      %c0_33 = arith.constant 0 : index
      %125 = vector.load %arg8[%124, %c0_33] : memref<8x130xf32, #tpu.memory_space<vmem>>, vector<8x130xf32>
      tpu.vector_store %arg8[%124, %c0_33], %123 {strides = array<i32>} : memref<8x130xf32, #tpu.memory_space<vmem>>, vector<8x130xf32>,
    } else {
    }
    %c1_i32 = arith.constant 1 : i32
    %8 = arith.cmpi eq, %arg0, %c1_i32 : i32
    %9 = arith.extui %8 : i1 to i32
    %c0_i32_2 = arith.constant 0 : i32
    %10 = arith.cmpi ne, %9, %c0_i32_2 : i32
    scf.if %10 {
      %11 = arith.index_cast %1 : i32 to index
      %c0_3 = arith.constant 0 : index
      %12 = vector.load %arg8[%11, %c0_3] : memref<8x130xf32, #tpu.memory_space<vmem>>, vector<8x130xf32>
      %13 = vector.extract_strided_slice %12 {offsets = [0, 128], sizes = [8, 1], strides = [1, 1]} : vector<8x130xf32> to vector<8x1xf32>
      %c0_4 = arith.constant 0 : index
      %c0_5 = arith.constant 0 : index
      %14 = vector.load %arg8[%c0_4, %c0_5] : memref<8x130xf32, #tpu.memory_space<vmem>>, vector<8x130xf32>
      %15 = vector.extract_strided_slice %14 {offsets = [0, 129], sizes = [8, 1], strides = [1, 1]} : vector<8x130xf32> to vector<8x1xf32>
      %16 = tpu.transpose %15, [1, 0] : vector<8x1xf32> -> vector<1x8xf32>
      %17 = vector.extract_strided_slice %14 {offsets = [0, 0], sizes = [8, 128], strides = [1, 1]} : vector<8x130xf32> to vector<8x128xf32>
      %18 = arith.truncf %17 : vector<8x128xf32> to vector<8x128xbf16>
      %19 = vector.broadcast %13 : vector<8x1xf32> to vector<8x8xf32>
      %20 = vector.broadcast %16 : vector<1x8xf32> to vector<8x8xf32>
      %21 = arith.addf %19, %20 : vector<8x8xf32>
      %cst_6 = arith.constant 2.000000e-01 : f32
      %22 = vector.broadcast %cst_6 : f32 to vector<8x8xf32>
      %23 = arith.mulf %22, %21 : vector<8x8xf32>
      %24 = arith.maximumf %21, %23 : vector<8x8xf32>
      %cst_7 = arith.constant -1.000000e+09 : f32
      %25 = vector.broadcast %cst_7 : f32 to vector<8x8xf32>
      %26 = arith.select %4, %25, %24 : vector<8x8xi1>, vector<8x8xf32>
      %cst_8 = arith.constant dense<0xFF800000> : vector<8xf32>
      %27 = vector.multi_reduction <maximumf>, %26, %cst_8 [1] : vector<8x8xf32> to vector<8xf32>
      %28 = vector.shape_cast %27 : vector<8xf32> to vector<8x1xf32>
      %29 = vector.broadcast %28 : vector<8x1xf32> to vector<8x8xf32>
      %30 = arith.subf %26, %29 : vector<8x8xf32>
      %31 = math.exp %30 : vector<8x8xf32>
      %cst_9 = arith.constant dense<0.000000e+00> : vector<8xf32>
      %32 = vector.multi_reduction <add>, %31, %cst_9 [1] : vector<8x8xf32> to vector<8xf32>
      %33 = vector.shape_cast %32 : vector<8xf32> to vector<8x1xf32>
      %34 = tpu.reciprocal %33 {approx = true} : vector<8x1xf32> -> vector<8x1xf32>
      %35 = vector.broadcast %34 : vector<8x1xf32> to vector<8x8xf32>
      %36 = arith.mulf %31, %35 : vector<8x8xf32>
      %37 = arith.truncf %36 : vector<8x8xf32> to vector<8x8xbf16>
      %cst_10 = arith.constant dense<0.000000e+00> : vector<8x128xf32>
      %38 = tpu.matmul %37, %18, %cst_10 {dimension_numbers = #tpu.dot_dimension_numbers<[1], [0], [0], [1], [0, 0, 1, 1], [], []>} : vector<8x8xbf16>, vector<8x128xbf16>, vector<8x128xf32> -> vector<8x128xf32>
      %39 = arith.extf %2 : vector<8x8xbf16> to vector<8x8xf32>
      %cst_11 = arith.constant dense<0.000000e+00> : vector<8xf32>
      %40 = vector.multi_reduction <add>, %39, %cst_11 [1] : vector<8x8xf32> to vector<8xf32>
      %41 = vector.shape_cast %40 : vector<8xf32> to vector<8x1xf32>
      %cst_12 = arith.constant 0.000000e+00 : f32
      %42 = vector.broadcast %cst_12 : f32 to vector<8x1xf32>
      %43 = arith.cmpf oeq, %41, %42 : vector<8x1xf32>
      %cst_13 = arith.constant 0.000000e+00 : f32
      %44 = vector.shape_cast %43 : vector<8x1xi1> to vector<8x1xi1>
      %45 = vector.broadcast %44 : vector<8x1xi1> to vector<8x128xi1>
      %46 = vector.broadcast %cst_13 : f32 to vector<8x128xf32>
      %47 = arith.select %45, %46, %38 : vector<8x128xi1>, vector<8x128xf32>
      %c0_14 = arith.constant 0 : index
      %c0_15 = arith.constant 0 : index
      %48 = vector.load %arg6[%c0_14, %c0_15] : memref<8x128xf32, #tpu.memory_space<vmem>>, vector<8x128xf32>
      tpu.vector_store %arg6[%c0_14, %c0_15], %47 {strides = array<i32>} : memref<8x128xf32, #tpu.memory_space<vmem>>, vector<8x128xf32>,
    } else {
    }
    return
  }
  func.func @transform_0(%arg0: i32, %arg1: i32) -> (i32, i32) {
    %c0_i32 = arith.constant 0 : i32
    %c0_i32_0 = arith.constant 0 : i32
    %c0_i32_1 = arith.constant 0 : i32
    return %c0_i32, %c0_i32_0 : i32, i32
  }
  func.func @transform_1(%arg0: i32, %arg1: i32) -> (i32, i32) {
    %c0_i32 = arith.constant 0 : i32
    %c0_i32_0 = arith.constant 0 : i32
    return %arg1, %c0_i32 : i32, i32
  }
  func.func @transform_2(%arg0: i32, %arg1: i32) -> (i32, i32) {
    %c0_i32 = arith.constant 0 : i32
    %c0_i32_0 = arith.constant 0 : i32
    %c0_i32_1 = arith.constant 0 : i32
    return %c0_i32, %c0_i32_0 : i32, i32
  }
  func.func @transform_3(%arg0: i32, %arg1: i32) -> (i32, i32) {
    %c0_i32 = arith.constant 0 : i32
    %c0_i32_0 = arith.constant 0 : i32
    %c0_i32_1 = arith.constant 0 : i32
    return %c0_i32, %c0_i32_0 : i32, i32
  }
  func.func @transform_4(%arg0: i32, %arg1: i32) -> (i32, i32) {
    %0 = arith.muli %arg1, %arg0 : i32
    %c0_i32 = arith.constant 0 : i32
    %c0_i32_0 = arith.constant 0 : i32
    return %0, %c0_i32 : i32, i32
  }
}

</mosaic_0001>

<llo_original>
// kernel: tpu_custom_call.1
$region0: #{tpu_custom_call.1}
  #allocation0 [shape = 'u32[]', space=smem, size = 0x4, offset = 0x4, fixed_abs, tag = 'smem constant byte address 0x4 - core index']
  #allocation1 [shape = 'u32[144,128]{1,0:T(1,128)}', space=vmem, size = 0x12000, scoped, tag = 'internal scratch']
  #allocation2 [shape = 'f32[8,40]{1,0:T(8,128)}', space=vmem, size = 0x1000, scoped, tag = 'scratch operand']
  #allocation3 [shape = 'f32[8,130]{1,0:T(8,128)}', space=vmem, size = 0x2000, scoped, tag = 'scratch operand']
  %s0 = inlined_call_operand.hbm [shape: f32[8,16], index: 0, kind: input, shape index: {}]
  %s1 = inlined_call_operand.hbm [shape: bf16[8,8], index: 1, kind: input, shape index: {}]
  %s2 = inlined_call_operand.hbm [shape: bf16[16,40], index: 2, kind: input, shape index: {}]
  %s3 = inlined_call_operand.hbm [shape: bf16[32,130], index: 3, kind: input, shape index: {}]
  %s4 = inlined_call_operand.hbm [shape: f32[8,128], index: 4, kind: output, shape index: {}]
  %s5 = sld [smem:[#allocation0]]
  $region77: #{tpu_custom_call.1} parent=0
    _
  %s7 = ssub.s32 1, %s5
  %s8 = scalar_select 0, %s7, %s5
  $region1: #{tpu_custom_call.1} parent=0
    #allocation4 [shape = 'u8[4096]{0}', space=vmem, size = 0x1000, scoped, tag = 'input window, operand 0, single buffered']
    #allocation5 [shape = 's32[2]{0}', space=sflag, size = 0x8, scoped, tag = 'scoped memory for tpu_custom_call.1']
    #allocation6 [shape = 's32[2]{0}', space=sflag, size = 0x8, scoped, tag = 'scoped memory for tpu_custom_call.1']
    #allocation7 [shape = 'u8[2048]{0}', space=vmem, size = 0x800, scoped, tag = 'input window, operand 1, single buffered']
    #allocation8 [shape = 's32[1]{0}', space=sflag, size = 0x4, scoped, tag = 'scoped memory for tpu_custom_call.1']
    #allocation9 [shape = 'u8[4096]{0}', space=vmem, size = 0x1000, scoped, tag = 'input window, operand 2, single buffered']
    #allocation10 [shape = 'u8[16384]{0}', space=vmem, size = 0x4000, scoped, tag = 'input window, operand 3, single buffered']
    #allocation11 [shape = 's32[1]{0}', space=sflag, size = 0x4, scoped, tag = 'scoped memory for tpu_custom_call.1']
    #allocation12 [shape = 'u8[8192]{0}', space=vmem, size = 0x2000, scoped, tag = 'output window, operand 0']
    %9 = vsyncpa [#allocation5], 0
    %10 = vsyncpa [#allocation8], 0
    %11 = vsyncpa [#allocation11], 0
    %12 = vsyncpa [#allocation6], 0
    %s13 = scalar_lea.sflag [#allocation6], 1
    %14 = vsyncpa %s13, 0
    loop: start=0, step=1, limit=4
    $region2: #{tpu_custom_call.1} parent=1 // loop_pre_header
      _
    $region3: #{tpu_custom_call.1} parent=1 // loop_header
      %s16 = sphi 0, %s20
      %p17 = scmp.ge.s32.totalorder %s16, 4
      %s23 = sphi 0, %s35
      %s24 = sphi 0, %s31
      %s25 = sphi 0, %s23
      %s26 = sphi 0, %s24
      %s27 = sphi 0, %s25
      %s28 = sphi 0, %s26
      %s36 = sphi 0, %s36
      %s38 = sphi 0, %s36
      %s39 = sphi 0, %s38
      %s53 = sphi 0, %s39
      %s59 = sphi 0, %s61
      %s62 = sphi 0, %s59
      %s63 = sphi 0, %s62
      %s79 = sphi 0, %s63
      %s83 = sphi 0, %s83
      %s85 = sphi 0, %s83
      %s86 = sphi 0, %s85
      %s100 = sphi 0, %s86
      %s104 = sphi 0, %s104
      %s106 = sphi 0, %s104
      %s107 = sphi 0, %s106
      %s121 = sphi 0, %s107
      %s129 = sphi 0, %s131
      %s132 = sphi 0, %s129
      %s133 = sphi 0, %s132
      %s149 = sphi 0, %s133
    $region4: #{tpu_custom_call.1} parent=1 // loop_header_branch
      %19 = sbr.rel (%p17) target = $region8
    $region5: #{tpu_custom_call.1} parent=1 // loop_body
      %s21 = ssub.s32 %s16, 1
      %s22 = ssub.s32 %s16, 2
      %s29 = sadd.s32 1, %s24
      %p30 = scmp.ge.s32.totalorder %s29, 1
      %s31 = scalar_select %p30, 0, %s29
      %s32 = sadd.s32 1, %s23
      %s33 = scalar_select %p30, %s32, %s23
      %p34 = scmp.ge.s32.totalorder %s33, 2
      %s35 = scalar_select %p34, 0, %s33
      %s37 = sadd.s32 %s36, 1
      %p40 = scmp.eq.s32.totalorder %s16, 1
      %p41 = scmp.ne.s32.totalorder %s36, %s38
      %p42 = scmp.eq.s32.totalorder %s16, 0
      %p43 = por %p41, %p42
      %p44 = scmp.ne.s32.totalorder %s36, %s38
      %p45 = scmp.eq.s32.totalorder %s21, 1
      %p46 = por %p44, %p45
      %p47 = scmp.ne.s32.totalorder %s38, %s39
      %p48 = scmp.eq.s32.totalorder %s21, 0
      %p49 = por %p47, %p48
      %p50 = scmp.ne.s32.totalorder %s38, %s39
      %p51 = scmp.eq.s32.totalorder %s22, 1
      %p52 = por %p50, %p51
      %p54 = scmp.ne.s32.totalorder %s39, %s53
      %p55 = scmp.eq.s32.totalorder %s22, 0
      %p56 = por %p54, %p55
      %s57 = ssub.s32 %s24, %s31
      %p58 = scmp.eq.s32.totalorder %s57, 0
      %s60 = sadd.s32 %s59, 1
      %s61 = scalar_select %p58, %s59, %s60
      %p64 = pneg %p58
      %p65 = scmp.eq.s32.totalorder %s16, 1
      %p66 = por %p64, %p65
      %p67 = scmp.ne.s32.totalorder %s59, %s62
      %p68 = scmp.eq.s32.totalorder %s16, 0
      %p69 = por %p67, %p68
      %p70 = scmp.ne.s32.totalorder %s59, %s62
      %p71 = scmp.eq.s32.totalorder %s21, 1
      %p72 = por %p70, %p71
      %p73 = scmp.ne.s32.totalorder %s62, %s63
      %p74 = scmp.eq.s32.totalorder %s21, 0
      %p75 = por %p73, %p74
      %p76 = scmp.ne.s32.totalorder %s62, %s63
      %p77 = scmp.eq.s32.totalorder %s22, 1
      %p78 = por %p76, %p77
      %p80 = scmp.ne.s32.totalorder %s63, %s79
      %p81 = scmp.eq.s32.totalorder %s22, 0
      %p82 = por %p80, %p81
      %s84 = sadd.s32 %s83, 1
      %p87 = scmp.eq.s32.totalorder %s16, 1
      %p88 = scmp.ne.s32.totalorder %s83, %s85
      %p89 = scmp.eq.s32.totalorder %s16, 0
      %p90 = por %p88, %p89
      %p91 = scmp.ne.s32.totalorder %s83, %s85
      %p92 = scmp.eq.s32.totalorder %s21, 1
      %p93 = por %p91, %p92
      %p94 = scmp.ne.s32.totalorder %s85, %s86
      %p95 = scmp.eq.s32.totalorder %s21, 0
      %p96 = por %p94, %p95
      %p97 = scmp.ne.s32.totalorder %s85, %s86
      %p98 = scmp.eq.s32.totalorder %s22, 1
      %p99 = por %p97, %p98
      %p101 = scmp.ne.s32.totalorder %s86, %s100
      %p102 = scmp.eq.s32.totalorder %s22, 0
      %p103 = por %p101, %p102
      %s105 = sadd.s32 %s104, 1
      %p108 = scmp.eq.s32.totalorder %s16, 1
      %p109 = scmp.ne.s32.totalorder %s104, %s106
      %p110 = scmp.eq.s32.totalorder %s16, 0
      %p111 = por %p109, %p110
      %p112 = scmp.ne.s32.totalorder %s104, %s106
      %p113 = scmp.eq.s32.totalorder %s21, 1
      %p114 = por %p112, %p113
      %p115 = scmp.ne.s32.totalorder %s106, %s107
      %p116 = scmp.eq.s32.totalorder %s21, 0
      %p117 = por %p115, %p116
      %p118 = scmp.ne.s32.totalorder %s106, %s107
      %p119 = scmp.eq.s32.totalorder %s22, 1
      %p120 = por %p118, %p119
      %p122 = scmp.ne.s32.totalorder %s107, %s121
      %p123 = scmp.eq.s32.totalorder %s22, 0
      %p124 = por %p122, %p123
      %s125 = smul.u32 %s24, %s23
      %s126 = smul.u32 %s31, %s35
      %s127 = ssub.s32 %s125, %s126
      %p128 = scmp.eq.s32.totalorder %s127, 0
      %s130 = sadd.s32 %s129, 1
      %s131 = scalar_select %p128, %s129, %s130
      %p134 = pneg %p128
      %p135 = scmp.eq.s32.totalorder %s16, 1
      %p136 = por %p134, %p135
      %p137 = scmp.ne.s32.totalorder %s129, %s132
      %p138 = scmp.eq.s32.totalorder %s16, 0
      %p139 = por %p137, %p138
      %p140 = scmp.ne.s32.totalorder %s129, %s132
      %p141 = scmp.eq.s32.totalorder %s21, 1
      %p142 = por %p140, %p141
      %p143 = scmp.ne.s32.totalorder %s132, %s133
      %p144 = scmp.eq.s32.totalorder %s21, 0
      %p145 = por %p143, %p144
      %p146 = scmp.ne.s32.totalorder %s132, %s133
      %p147 = scmp.eq.s32.totalorder %s22, 1
      %p148 = por %p146, %p147
      %p150 = scmp.ne.s32.totalorder %s133, %s149
      %p151 = scmp.eq.s32.totalorder %s22, 0
      %p152 = por %p150, %p151
      %p153 = scmp.le.s32.totalorder 1, %s16
      %p154 = scmp.lt.s32.totalorder %s16, 3
      %p155 = pnand %p153, %p154
      %p156 = pneg %p155
      // Predicated region
      $region9: #{tpu_custom_call.1} parent=5 // pred_check
        _
      $region10: #{tpu_custom_call.1} parent=5 // pred_check_branch
        %158 = sbr.rel (%p155) target = $region12
      $region11: #{tpu_custom_call.1} parent=5 // pred_region
        %s159 = ssub.s32 %s16, 1
        // Predicated region
        $region13: #{tpu_custom_call.1} parent=11 // pred_check
          %p160 = pneg %p49
        $region14: #{tpu_custom_call.1} parent=11 // pred_check_branch
          %162 = sbr.rel (%p160) target = $region16
        $region15: #{tpu_custom_call.1} parent=11 // pred_region
          %s164 = ssub.s32 128, 128
          %165 = vsyncadd [#allocation5], %s164
          %s167 = sshll.u32 [#allocation4], 4
          %s168 = int_to_ptr.vmem [resolvable:$true] %s167
          %170 = dma.hbm_to_vmem [thread:$0]  %s0, 128, %s168, [#allocation5]
        $region16: #{tpu_custom_call.1} parent=11 // pred_fallthru
          _
        // Predicated region
        $region17: #{tpu_custom_call.1} parent=11 // pred_check
          %p171 = pneg %p75
        $region18: #{tpu_custom_call.1} parent=11 // pred_check_branch
          %173 = sbr.rel (%p171) target = $region20
        $region19: #{tpu_custom_call.1} parent=11 // pred_region
          %s175 = ssub.s32 64, 64
          %176 = vsyncadd [#allocation8], %s175
          %s177 = smul.addr %s26, 64
          %s178 = scalar_lea.hbm %s1, %s177
          %s180 = sshll.u32 [#allocation7], 4
          %s181 = int_to_ptr.vmem [resolvable:$true] %s180
          %183 = dma.hbm_to_vmem [thread:$0]  %s178, 64, %s181, [#allocation8]
        $region20: #{tpu_custom_call.1} parent=11 // pred_fallthru
          _
        // Predicated region
        $region21: #{tpu_custom_call.1} parent=11 // pred_check
          %p184 = pneg %p96
        $region22: #{tpu_custom_call.1} parent=11 // pred_check_branch
          %186 = sbr.rel (%p184) target = $region24
        $region23: #{tpu_custom_call.1} parent=11 // pred_region
          %s188 = ssub.s32 128, 128
          %189 = vsyncadd [#allocation8], %s188
          %s190 = sshll.u32 [#allocation9], 4
          %s191 = int_to_ptr.vmem [resolvable:$true] %s190
          %196 = dma.hbm_to_vmem [thread:$0]  %s2, 128, %s191, [#allocation8], 64, 64, 4
        $region24: #{tpu_custom_call.1} parent=11 // pred_fallthru
          _
        // Predicated region
        $region25: #{tpu_custom_call.1} parent=11 // pred_check
          %p197 = pneg %p117
        $region26: #{tpu_custom_call.1} parent=11 // pred_check_branch
          %199 = sbr.rel (%p197) target = $region28
        $region27: #{tpu_custom_call.1} parent=11 // pred_region
          %s201 = ssub.s32 512, 512
          %202 = vsyncadd [#allocation11], %s201
          %s203 = sshll.u32 [#allocation10], 4
          %s204 = int_to_ptr.vmem [resolvable:$true] %s203
          %209 = dma.hbm_to_vmem [thread:$0]  %s3, 512, %s204, [#allocation11], 128, 128, 8
        $region28: #{tpu_custom_call.1} parent=11 // pred_fallthru
          _
      $region12: #{tpu_custom_call.1} parent=5 // pred_fallthru
        _
      %p210 = scmp.lt.s32.totalorder %s16, 2
      // Predicated region
      $region29: #{tpu_custom_call.1} parent=5 // pred_check
        %p211 = pneg %p210
      $region30: #{tpu_custom_call.1} parent=5 // pred_check_branch
        %213 = sbr.rel (%p211) target = $region32
      $region31: #{tpu_custom_call.1} parent=5 // pred_region
        _
      $region32: #{tpu_custom_call.1} parent=5 // pred_fallthru
        _
      %p214 = scmp.le.s32.totalorder 1, %s16
      %p215 = scmp.lt.s32.totalorder %s16, 3
      %p216 = pnand %p214, %p215
      %p217 = pneg %p216
      // Predicated region
      $region33: #{tpu_custom_call.1} parent=5 // pred_check
        _
      $region34: #{tpu_custom_call.1} parent=5 // pred_check_branch
        %219 = sbr.rel (%p216) target = $region36
      $region35: #{tpu_custom_call.1} parent=5 // pred_region
        %s220 = ssub.s32 %s16, 1
        // Predicated region
        $region37: #{tpu_custom_call.1} parent=35 // pred_check
          %p221 = pneg %p49
        $region38: #{tpu_custom_call.1} parent=35 // pred_check_branch
          %223 = sbr.rel (%p221) target = $region40
        $region39: #{tpu_custom_call.1} parent=35 // pred_region
          %224 = dma.done [#allocation5], 128
        $region40: #{tpu_custom_call.1} parent=35 // pred_fallthru
          _
        // Predicated region
        $region41: #{tpu_custom_call.1} parent=35 // pred_check
          %p225 = pneg %p75
        $region42: #{tpu_custom_call.1} parent=35 // pred_check_branch
          %227 = sbr.rel (%p225) target = $region44
        $region43: #{tpu_custom_call.1} parent=35 // pred_region
          %228 = dma.done [#allocation8], 64
        $region44: #{tpu_custom_call.1} parent=35 // pred_fallthru
          _
        // Predicated region
        $region45: #{tpu_custom_call.1} parent=35 // pred_check
          %p229 = pneg %p96
        $region46: #{tpu_custom_call.1} parent=35 // pred_check_branch
          %231 = sbr.rel (%p229) target = $region48
        $region47: #{tpu_custom_call.1} parent=35 // pred_region
          %232 = dma.done [#allocation8], 128
        $region48: #{tpu_custom_call.1} parent=35 // pred_fallthru
          _
        // Predicated region
        $region49: #{tpu_custom_call.1} parent=35 // pred_check
          %p233 = pneg %p117
        $region50: #{tpu_custom_call.1} parent=35 // pred_check_branch
          %235 = sbr.rel (%p233) target = $region52
        $region51: #{tpu_custom_call.1} parent=35 // pred_region
          %236 = dma.done [#allocation11], 512
        $region52: #{tpu_custom_call.1} parent=35 // pred_fallthru
          _
        %p237 = pneg %p49
        %p238 = pneg %p46
        %p239 = pneg %p75
        %p240 = pneg %p72
        %p241 = pneg %p96
        %p242 = pneg %p93
        %p243 = pneg %p117
        %p244 = pneg %p114
        %p245 = pneg %p145
        %p246 = pneg %p142
        %s247 = sand.u32 %s132, 1
        %s248 = scalar_lea.sflag [#allocation6], %s247
        %s249 = sand.u32 %s132, 1
        %s250 = smul.addr %s249, 8
        %s251 = scalar_lea.vmem [#allocation12], %s250
        %s252 = smul.u32 %s26, %s25
        %s256 = smul.u32 %s26, 8
        %v257 = vld [vmem:[#allocation7] sm:$0xf]
        %vm258 = vcmp.eq.bf16.partialorder %v257, 0
        %p259 = scmp.eq.s32.totalorder %s25, 0
        // Predicated region
        $region53: #{tpu_custom_call.1} parent=35 // pred_check
          %p260 = pneg %p259
        $region54: #{tpu_custom_call.1} parent=35 // pred_check_branch
          %262 = sbr.rel (%p260) target = $region56
        $region55: #{tpu_custom_call.1} parent=35 // pred_region
          %p263 = scmp.eq.s32.totalorder %s26, 0
          // Predicated region
          $region57: #{tpu_custom_call.1} parent=55 // pred_check
            %p264 = pneg %p263
          $region58: #{tpu_custom_call.1} parent=55 // pred_check_branch
            %266 = sbr.rel (%p264) target = $region60
          $region59: #{tpu_custom_call.1} parent=55 // pred_region
            %v267 = vld [vmem:[#allocation4] sm:$0xff]
            %v268 = vpack.c.bf16 %v267, %v267
            %v269 = vld [vmem:[#allocation9] sm:$0xf]
            %v270 = vld [vmem:[#allocation9 + $0x4] sm:$0xf]
            %v273 = vunpack.c.l.b16 %v269
            %v274 = vunpack.c.l.b16 %v270
            %v275 = vpack.c.b16 %v274, %v273
            %vm277 = vcmask 130048
            %v279 = vsel %vm277, %v268, 0
            %281 = vmatprep.subr.bf16.mxu0 0
            %282 = vmatpush1.bf16.msra.mxu0 %v275
            %283 = vmatprep.subr.bf16.mxu0 0
            %284 = vmatpush1.bf16.msra.mxu0 0
            %285 = vmatprep.subr.bf16.mxu0 0
            %286 = vmatpush1.bf16.msra.mxu0 0
            %287 = vmatprep.subr.bf16.mxu0 0
            %288 = vmatpush1.bf16.msra.mxu0 0
            %289 = vmatprep.subr.bf16.mxu0 0
            %290 = vmatpush1.bf16.msra.mxu0 0
            %291 = vmatprep.subr.bf16.mxu0 0
            %292 = vmatpush1.bf16.msra.mxu0 0
            %293 = vmatprep.subr.bf16.mxu0 0
            %294 = vmatpush1.bf16.msra.mxu0 0
            %295 = vmatprep.subr.bf16.mxu0 0
            %296 = vmatpush1.bf16.msra.mxu0 0
            %297 = vmatprep.subr.bf16.mxu0 0
            %298 = vmatpush1.bf16.msra.mxu0 0
            %299 = vmatprep.subr.bf16.mxu0 0
            %300 = vmatpush1.bf16.msra.mxu0 0
            %301 = vmatprep.subr.bf16.mxu0 0
            %302 = vmatpush1.bf16.msra.mxu0 0
            %303 = vmatprep.subr.bf16.mxu0 0
            %304 = vmatpush1.bf16.msra.mxu0 0
            %305 = vmatprep.subr.bf16.mxu0 0
            %306 = vmatpush1.bf16.msra.mxu0 0
            %307 = vmatprep.subr.bf16.mxu0 0
            %308 = vmatpush1.bf16.msra.mxu0 0
            %309 = vmatprep.subr.bf16.mxu0 0
            %310 = vmatpush1.bf16.msra.mxu0 0
            %311 = vmatprep.subr.bf16.mxu0 0
            %312 = vmatpush1.bf16.msra.mxu0 0
            %313 = vmatprep.mubr.bf16.mxu0 0
            %314 = vmatmul.mubr.bf16.gmra.mrb[0].mxu0 %v279
            %v315 = vpop.f32.mrb[0].mxu0
            %v316 = vadd.f32 0.0, %v315
            %v317 = vpop.f32.mrb[0].mxu0
            %v318 = vpop.f32.mrb[0].mxu0
            %v319 = vpop.f32.mrb[0].mxu0
            %320 = vdwg.mxu0
            %vm321 = vcmask 326656
            %322 = vst.msk [vmem:[#allocation2] sm:$0xff] %vm321, %v316
          $region60: #{tpu_custom_call.1} parent=55 // pred_fallthru
            _
          %s323 = scalar_lea.vmem [#allocation2], %s256
          %v324 = vld [vmem:[%s323] sm:$0xff]
          %v325 = vld [vmem:[#allocation2] sm:$0xff]
          %327 = vrot.lane.b32.xlu0 %v325, 92
          %v328 = vpop.permute.xlu0 %327
          %330 = vxpose.xlu0.b32.start [1/16] %v328, 128
          %331 = vxpose.xlu0.b32.cont [2/16] 0.0, 128
          %332 = vxpose.xlu0.b32.cont [3/16] 0.0, 128
          %333 = vxpose.xlu0.b32.cont [4/16] 0.0, 128
          %334 = vxpose.xlu0.b32.cont [5/16] 0.0, 128
          %335 = vxpose.xlu0.b32.cont [6/16] 0.0, 128
          %336 = vxpose.xlu0.b32.cont [7/16] 0.0, 128
          %337 = vxpose.xlu0.b32.cont [8/16] 0.0, 128
          %338 = vxpose.xlu0.b32.cont [9/16] 0.0, 128
          %339 = vxpose.xlu0.b32.cont [10/16] 0.0, 128
          %340 = vxpose.xlu0.b32.cont [11/16] 0.0, 128
          %341 = vxpose.xlu0.b32.cont [12/16] 0.0, 128
          %342 = vxpose.xlu0.b32.cont [13/16] 0.0, 128
          %343 = vxpose.xlu0.b32.cont [14/16] 0.0, 128
          %344 = vxpose.xlu0.b32.cont [15/16] 0.0, 128
          %345 = vxpose.xlu0.b32.end [16/16] 0.0, 128
          %v346 = vpop.trf.xlu0
          %v347 = vpop.trf.xlu0
          %v348 = vpop.trf.xlu0
          %v349 = vpop.trf.xlu0
          %v350 = vpop.trf.xlu0
          %v351 = vpop.trf.xlu0
          %v352 = vpop.trf.xlu0
          %v353 = vpop.trf.xlu0
          %v354 = vpop.trf.xlu0
          %v355 = vpop.trf.xlu0
          %v356 = vpop.trf.xlu0
          %v357 = vpop.trf.xlu0
          %v358 = vpop.trf.xlu0
          %v359 = vpop.trf.xlu0
          %v360 = vpop.trf.xlu0
          %v361 = vpop.trf.xlu0
          %v362 = vpack.c.bf16 %v325, %v325
          %364 = vset.pattern.permute.xlu0 32
          %365 = vperm.xlu0 %364, %v324
          %v366 = vpop.permute.xlu0 %365
          %v368 = vlaneseq
          %v369 = vshrl.u32 %v368, 7
          %v370 = vsub.s32 0, %v369
          %v371 = vrot.slane %v346, %v370
          %v372 = vadd.f32 %v366, %v371
          %v373 = vmul.f32 %v372, 0.2
          %v374 = vmax.f32 %v372, %v373
          %v375 = vsel %vm258, 65537, 0
          %v376 = vunpack.c.l.b16 %v375
          %vm377 = vcmp.ne.s32.totalorder %v376, 0
          %v378 = vsel %vm377, -1e+09, %v374
          %vm379 = vcmask 64512
          %v380 = vsel %vm379, %v378, -inf
          %381 = vmax.xlane.f32.xlu0 %v380
          %v382 = vpop.xlane.xlu0 %381
          %v383 = vsub.f32 %v378, %v382
          %v384 = vmul.f32 %v383, 1.442695
          %v385 = vpow.pop %v384
          %v386 = vsel %vm379, %v385, 0.0
          %387 = vadd.xlane.f32.xlu0 %v386
          %v388 = vpop.xlane.xlu0 %387
          %v389 = vrcp.pop %v388
          %v390 = vmul.f32 %v385, %v389
          %v391 = vpack.c.bf16 %v390, %v390
          %v393 = vsel %vm379, %v391, 0
          %vm395 = vcmask 1043456
          %v397 = vsel %vm395, %v362, 0
          %399 = vmatprep.subr.bf16.mxu0 0
          %400 = vmatpush1.bf16.msra.mxu0 %v397
          %401 = vmatprep.subr.bf16.mxu0 0
          %402 = vmatpush1.bf16.msra.mxu0 0
          %403 = vmatprep.subr.bf16.mxu0 0
          %404 = vmatpush1.bf16.msra.mxu0 0
          %405 = vmatprep.subr.bf16.mxu0 0
          %406 = vmatpush1.bf16.msra.mxu0 0
          %407 = vmatprep.subr.bf16.mxu0 0
          %408 = vmatpush1.bf16.msra.mxu0 0
          %409 = vmatprep.subr.bf16.mxu0 0
          %410 = vmatpush1.bf16.msra.mxu0 0
          %411 = vmatprep.subr.bf16.mxu0 0
          %412 = vmatpush1.bf16.msra.mxu0 0
          %413 = vmatprep.subr.bf16.mxu0 0
          %414 = vmatpush1.bf16.msra.mxu0 0
          %415 = vmatprep.subr.bf16.mxu0 0
          %416 = vmatpush1.bf16.msra.mxu0 0
          %417 = vmatprep.subr.bf16.mxu0 0
          %418 = vmatpush1.bf16.msra.mxu0 0
          %419 = vmatprep.subr.bf16.mxu0 0
          %420 = vmatpush1.bf16.msra.mxu0 0
          %421 = vmatprep.subr.bf16.mxu0 0
          %422 = vmatpush1.bf16.msra.mxu0 0
          %423 = vmatprep.subr.bf16.mxu0 0
          %424 = vmatpush1.bf16.msra.mxu0 0
          %425 = vmatprep.subr.bf16.mxu0 0
          %426 = vmatpush1.bf16.msra.mxu0 0
          %427 = vmatprep.subr.bf16.mxu0 0
          %428 = vmatpush1.bf16.msra.mxu0 0
          %429 = vmatprep.subr.bf16.mxu0 0
          %430 = vmatpush1.bf16.msra.mxu0 0
          %431 = vmatprep.mubr.bf16.mxu0 0
          %432 = vmatmul.mubr.bf16.gmra.mrb[0].mxu0 %v393
          %v433 = vpop.f32.mrb[0].mxu0
          %v434 = vadd.f32 0.0, %v433
          %v435 = vpop.f32.mrb[0].mxu0
          %v436 = vpop.f32.mrb[0].mxu0
          %v437 = vpop.f32.mrb[0].mxu0
          %438 = vdwg.mxu0
          %439 = vset.pattern.permute.xlu0 33
          %440 = vperm.xlu0 %439, %v324
          %v441 = vpop.permute.xlu0 %440
          %v443 = vlaneseq
          %v444 = vshrl.u32 %v443, 7
          %v445 = vsub.s32 1, %v444
          %v446 = vrot.slane %v346, %v445
          %v447 = vadd.f32 %v441, %v446
          %v448 = vmul.f32 %v447, 0.2
          %v449 = vmax.f32 %v447, %v448
          %v450 = vsel %vm377, -1e+09, %v449
          %v451 = vsel %vm379, %v450, -inf
          %452 = vmax.xlane.f32.xlu0 %v451
          %v453 = vpop.xlane.xlu0 %452
          %v454 = vsub.f32 %v450, %v453
          %v455 = vmul.f32 %v454, 1.442695
          %v456 = vpow.pop %v455
          %v457 = vsel %vm379, %v456, 0.0
          %458 = vadd.xlane.f32.xlu0 %v457
          %v459 = vpop.xlane.xlu0 %458
          %v460 = vrcp.pop %v459
          %v461 = vmul.f32 %v456, %v460
          %v462 = vpack.c.bf16 %v461, %v461
          %464 = vrot.lane.b32.xlu0 %v362, 120
          %v465 = vpop.permute.xlu0 %464
          %v467 = vsel %vm379, %v462, 0
          %v470 = vsel %vm395, %v465, 0
          %472 = vmatprep.subr.bf16.mxu0 0
          %473 = vmatpush1.bf16.msra.mxu0 %v470
          %474 = vmatprep.subr.bf16.mxu0 0
          %475 = vmatpush1.bf16.msra.mxu0 0
          %476 = vmatprep.subr.bf16.mxu0 0
          %477 = vmatpush1.bf16.msra.mxu0 0
          %478 = vmatprep.subr.bf16.mxu0 0
          %479 = vmatpush1.bf16.msra.mxu0 0
          %480 = vmatprep.subr.bf16.mxu0 0
          %481 = vmatpush1.bf16.msra.mxu0 0
          %482 = vmatprep.subr.bf16.mxu0 0
          %483 = vmatpush1.bf16.msra.mxu0 0
          %484 = vmatprep.subr.bf16.mxu0 0
          %485 = vmatpush1.bf16.msra.mxu0 0
          %486 = vmatprep.subr.bf16.mxu0 0
          %487 = vmatpush1.bf16.msra.mxu0 0
          %488 = vmatprep.subr.bf16.mxu0 0
          %489 = vmatpush1.bf16.msra.mxu0 0
          %490 = vmatprep.subr.bf16.mxu0 0
          %491 = vmatpush1.bf16.msra.mxu0 0
          %492 = vmatprep.subr.bf16.mxu0 0
          %493 = vmatpush1.bf16.msra.mxu0 0
          %494 = vmatprep.subr.bf16.mxu0 0
          %495 = vmatpush1.bf16.msra.mxu0 0
          %496 = vmatprep.subr.bf16.mxu0 0
          %497 = vmatpush1.bf16.msra.mxu0 0
          %498 = vmatprep.subr.bf16.mxu0 0
          %499 = vmatpush1.bf16.msra.mxu0 0
          %500 = vmatprep.subr.bf16.mxu0 0
          %501 = vmatpush1.bf16.msra.mxu0 0
          %502 = vmatprep.subr.bf16.mxu0 0
          %503 = vmatpush1.bf16.msra.mxu0 0
          %504 = vmatprep.mubr.bf16.mxu0 0
          %505 = vmatmul.mubr.bf16.gmra.mrb[0].mxu0 %v467
          %v506 = vpop.f32.mrb[0].mxu0
          %v507 = vadd.f32 0.0, %v506
          %v508 = vpop.f32.mrb[0].mxu0
          %v509 = vpop.f32.mrb[0].mxu0
          %v510 = vpop.f32.mrb[0].mxu0
          %511 = vdwg.mxu0
          %512 = vset.pattern.permute.xlu0 34
          %513 = vperm.xlu0 %512, %v324
          %v514 = vpop.permute.xlu0 %513
          %v516 = vlaneseq
          %v517 = vshrl.u32 %v516, 7
          %v518 = vsub.s32 2, %v517
          %v519 = vrot.slane %v346, %v518
          %v520 = vadd.f32 %v514, %v519
          %v521 = vmul.f32 %v520, 0.2
          %v522 = vmax.f32 %v520, %v521
          %v523 = vsel %vm377, -1e+09, %v522
          %v524 = vsel %vm379, %v523, -inf
          %525 = vmax.xlane.f32.xlu0 %v524
          %v526 = vpop.xlane.xlu0 %525
          %v527 = vsub.f32 %v523, %v526
          %v528 = vmul.f32 %v527, 1.442695
          %v529 = vpow.pop %v528
          %v530 = vsel %vm379, %v529, 0.0
          %531 = vadd.xlane.f32.xlu0 %v530
          %v532 = vpop.xlane.xlu0 %531
          %v533 = vrcp.pop %v532
          %v534 = vmul.f32 %v529, %v533
          %v535 = vpack.c.bf16 %v534, %v534
          %536 = vrot.lane.b32.xlu0 %v362, 112
          %v537 = vpop.permute.xlu0 %536
          %v539 = vsel %vm379, %v535, 0
          %v542 = vsel %vm395, %v537, 0
          %544 = vmatprep.subr.bf16.mxu0 0
          %545 = vmatpush1.bf16.msra.mxu0 %v542
          %546 = vmatprep.subr.bf16.mxu0 0
          %547 = vmatpush1.bf16.msra.mxu0 0
          %548 = vmatprep.subr.bf16.mxu0 0
          %549 = vmatpush1.bf16.msra.mxu0 0
          %550 = vmatprep.subr.bf16.mxu0 0
          %551 = vmatpush1.bf16.msra.mxu0 0
          %552 = vmatprep.subr.bf16.mxu0 0
          %553 = vmatpush1.bf16.msra.mxu0 0
          %554 = vmatprep.subr.bf16.mxu0 0
          %555 = vmatpush1.bf16.msra.mxu0 0
          %556 = vmatprep.subr.bf16.mxu0 0
          %557 = vmatpush1.bf16.msra.mxu0 0
          %558 = vmatprep.subr.bf16.mxu0 0
          %559 = vmatpush1.bf16.msra.mxu0 0
          %560 = vmatprep.subr.bf16.mxu0 0
          %561 = vmatpush1.bf16.msra.mxu0 0
          %562 = vmatprep.subr.bf16.mxu0 0
          %563 = vmatpush1.bf16.msra.mxu0 0
          %564 = vmatprep.subr.bf16.mxu0 0
          %565 = vmatpush1.bf16.msra.mxu0 0
          %566 = vmatprep.subr.bf16.mxu0 0
          %567 = vmatpush1.bf16.msra.mxu0 0
          %568 = vmatprep.subr.bf16.mxu0 0
          %569 = vmatpush1.bf16.msra.mxu0 0
          %570 = vmatprep.subr.bf16.mxu0 0
          %571 = vmatpush1.bf16.msra.mxu0 0
          %572 = vmatprep.subr.bf16.mxu0 0
          %573 = vmatpush1.bf16.msra.mxu0 0
          %574 = vmatprep.subr.bf16.mxu0 0
          %575 = vmatpush1.bf16.msra.mxu0 0
          %576 = vmatprep.mubr.bf16.mxu0 0
          %577 = vmatmul.mubr.bf16.gmra.mrb[0].mxu0 %v539
          %v578 = vpop.f32.mrb[0].mxu0
          %v579 = vadd.f32 0.0, %v578
          %v580 = vpop.f32.mrb[0].mxu0
          %v581 = vpop.f32.mrb[0].mxu0
          %v582 = vpop.f32.mrb[0].mxu0
          %583 = vdwg.mxu0
          %584 = vset.pattern.permute.xlu0 35
          %585 = vperm.xlu0 %584, %v324
          %v586 = vpop.permute.xlu0 %585
          %v588 = vlaneseq
          %v589 = vshrl.u32 %v588, 7
          %v590 = vsub.s32 3, %v589
          %v591 = vrot.slane %v346, %v590
          %v592 = vadd.f32 %v586, %v591
          %v593 = vmul.f32 %v592, 0.2
          %v594 = vmax.f32 %v592, %v593
          %v595 = vsel %vm377, -1e+09, %v594
          %v596 = vsel %vm379, %v595, -inf
          %597 = vmax.xlane.f32.xlu0 %v596
          %v598 = vpop.xlane.xlu0 %597
          %v599 = vsub.f32 %v595, %v598
          %v600 = vmul.f32 %v599, 1.442695
          %v601 = vpow.pop %v600
          %v602 = vsel %vm379, %v601, 0.0
          %603 = vadd.xlane.f32.xlu0 %v602
          %v604 = vpop.xlane.xlu0 %603
          %v605 = vrcp.pop %v604
          %v606 = vmul.f32 %v601, %v605
          %v607 = vpack.c.bf16 %v606, %v606
          %608 = vrot.lane.b32.xlu0 %v362, 104
          %v609 = vpop.permute.xlu0 %608
          %v611 = vsel %vm379, %v607, 0
          %v614 = vsel %vm395, %v609, 0
          %616 = vmatprep.subr.bf16.mxu0 0
          %617 = vmatpush1.bf16.msra.mxu0 %v614
          %618 = vmatprep.subr.bf16.mxu0 0
          %619 = vmatpush1.bf16.msra.mxu0 0
          %620 = vmatprep.subr.bf16.mxu0 0
          %621 = vmatpush1.bf16.msra.mxu0 0
          %622 = vmatprep.subr.bf16.mxu0 0
          %623 = vmatpush1.bf16.msra.mxu0 0
          %624 = vmatprep.subr.bf16.mxu0 0
          %625 = vmatpush1.bf16.msra.mxu0 0
          %626 = vmatprep.subr.bf16.mxu0 0
          %627 = vmatpush1.bf16.msra.mxu0 0
          %628 = vmatprep.subr.bf16.mxu0 0
          %629 = vmatpush1.bf16.msra.mxu0 0
          %630 = vmatprep.subr.bf16.mxu0 0
          %631 = vmatpush1.bf16.msra.mxu0 0
          %632 = vmatprep.subr.bf16.mxu0 0
          %633 = vmatpush1.bf16.msra.mxu0 0
          %634 = vmatprep.subr.bf16.mxu0 0
          %635 = vmatpush1.bf16.msra.mxu0 0
          %636 = vmatprep.subr.bf16.mxu0 0
          %637 = vmatpush1.bf16.msra.mxu0 0
          %638 = vmatprep.subr.bf16.mxu0 0
          %639 = vmatpush1.bf16.msra.mxu0 0
          %640 = vmatprep.subr.bf16.mxu0 0
          %641 = vmatpush1.bf16.msra.mxu0 0
          %642 = vmatprep.subr.bf16.mxu0 0
          %643 = vmatpush1.bf16.msra.mxu0 0
          %644 = vmatprep.subr.bf16.mxu0 0
          %645 = vmatpush1.bf16.msra.mxu0 0
          %646 = vmatprep.subr.bf16.mxu0 0
          %647 = vmatpush1.bf16.msra.mxu0 0
          %648 = vmatprep.mubr.bf16.mxu0 0
          %649 = vmatmul.mubr.bf16.gmra.mrb[0].mxu0 %v611
          %v650 = vpop.f32.mrb[0].mxu0
          %v651 = vadd.f32 0.0, %v650
          %v652 = vpop.f32.mrb[0].mxu0
          %v653 = vpop.f32.mrb[0].mxu0
          %v654 = vpop.f32.mrb[0].mxu0
          %655 = vdwg.mxu0
          %657 = vrot.lane.b32.xlu0 %v507, 8
          %v658 = vpop.permute.xlu0 %657
          %661 = vrot.lane.b32.xlu0 %v579, 16
          %v662 = vpop.permute.xlu0 %661
          %665 = vrot.lane.b32.xlu0 %v651, 24
          %v666 = vpop.permute.xlu0 %665
          %v668 = vsel %vm379, %v434, %v658
          %vm669 = vcmask 130048
          %v670 = vsel %vm669, %v668, %v662
          %vm671 = vcmask 195584
          %v672 = vsel %vm671, %v670, %v666
          %vm673 = vcmp.gt.f32.partialorder %v672, 0.0
          %v674 = vmul.f32 %v672, 1.442695
          %v675 = vpow.pop %v674
          %v676 = vsub.f32 %v675, 1.0
          %v677 = vsel %vm673, %v672, %v676
          %v678 = vpack.c.bf16 %v677, %v677
          %v679 = vld [vmem:[#allocation10] sm:$0xff]
          %v680 = vld [vmem:[#allocation10 + $0x8] sm:$0xff]
          %v681 = vld [vmem:[#allocation10 + $0x10] sm:$0xff]
          %v682 = vld [vmem:[#allocation10 + $0x18] sm:$0xff]
          %v687 = vunpack.c.l.b16 %v679
          %v688 = vunpack.c.h.b16 %v679
          %v689 = vunpack.c.l.b16 %v680
          %v690 = vunpack.c.h.b16 %v680
          %v691 = vunpack.c.l.b16 %v681
          %v692 = vunpack.c.h.b16 %v681
          %v693 = vunpack.c.l.b16 %v682
          %v694 = vunpack.c.h.b16 %v682
          %v695 = vpack.c.b16 %v689, %v687
          %v696 = vpack.c.b16 %v690, %v688
          %v697 = vpack.c.b16 %v693, %v691
          %v698 = vpack.c.b16 %v694, %v692
          %vm703 = vcmask 261120
          %v705 = vsel %vm703, %v678, 0
          %707 = vmatprep.subr.bf16.mxu0 %v696
          %708 = vmatpush1.bf16.msra.mxu0 %v695
          %709 = vmatprep.subr.bf16.mxu0 %v698
          %710 = vmatpush1.bf16.msra.mxu0 %v697
          %711 = vmatprep.subr.bf16.mxu0 0
          %712 = vmatpush1.bf16.msra.mxu0 0
          %713 = vmatprep.subr.bf16.mxu0 0
          %714 = vmatpush1.bf16.msra.mxu0 0
          %715 = vmatprep.subr.bf16.mxu0 0
          %716 = vmatpush1.bf16.msra.mxu0 0
          %717 = vmatprep.subr.bf16.mxu0 0
          %718 = vmatpush1.bf16.msra.mxu0 0
          %719 = vmatprep.subr.bf16.mxu0 0
          %720 = vmatpush1.bf16.msra.mxu0 0
          %721 = vmatprep.subr.bf16.mxu0 0
          %722 = vmatpush1.bf16.msra.mxu0 0
          %723 = vmatprep.subr.bf16.mxu0 0
          %724 = vmatpush1.bf16.msra.mxu0 0
          %725 = vmatprep.subr.bf16.mxu0 0
          %726 = vmatpush1.bf16.msra.mxu0 0
          %727 = vmatprep.subr.bf16.mxu0 0
          %728 = vmatpush1.bf16.msra.mxu0 0
          %729 = vmatprep.subr.bf16.mxu0 0
          %730 = vmatpush1.bf16.msra.mxu0 0
          %731 = vmatprep.subr.bf16.mxu0 0
          %732 = vmatpush1.bf16.msra.mxu0 0
          %733 = vmatprep.subr.bf16.mxu0 0
          %734 = vmatpush1.bf16.msra.mxu0 0
          %735 = vmatprep.subr.bf16.mxu0 0
          %736 = vmatpush1.bf16.msra.mxu0 0
          %737 = vmatprep.subr.bf16.mxu0 0
          %738 = vmatpush1.bf16.msra.mxu0 0
          %739 = vmatprep.mubr.bf16.mxu0 0
          %740 = vmatmul.mubr.bf16.gmra.mrb[0].mxu0 %v705
          %v741 = vpop.f32.mrb[0].mxu0
          %v742 = vadd.f32 0.0, %v741
          %v743 = vpop.f32.mrb[0].mxu0
          %v744 = vadd.f32 0.0, %v743
          %v745 = vpop.f32.mrb[0].mxu0
          %v746 = vpop.f32.mrb[0].mxu0
          %747 = vdwg.mxu0
          %s748 = sshra.s32 %s256, 3
          %s749 = sand.u32 %s256, 7
          %s750 = smul.u32 %s748, 2
          %s751 = smul.addr %s750, 8
          %s752 = scalar_lea.vmem [#allocation3], %s751
          %753 = vst [vmem:[%s752] sm:$0xff] %v742
          %vm754 = vcmask 15360
          %755 = vst.msk [vmem:[%s752 + $0x8] sm:$0xff] %vm754, %v744
        $region56: #{tpu_custom_call.1} parent=35 // pred_fallthru
          _
        %p756 = scmp.eq.s32.totalorder %s25, 1
        // Predicated region
        $region61: #{tpu_custom_call.1} parent=35 // pred_check
          %p757 = pneg %p756
        $region62: #{tpu_custom_call.1} parent=35 // pred_check_branch
          %759 = sbr.rel (%p757) target = $region64
        $region63: #{tpu_custom_call.1} parent=35 // pred_region
          %s760 = sshra.s32 %s256, 3
          %s761 = sand.u32 %s256, 7
          %s762 = smul.u32 %s760, 2
          %s763 = smul.addr %s762, 8
          %s764 = scalar_lea.vmem [#allocation3], %s763
          %v765 = vld [vmem:[%s764 + $0x8] sm:$0xff]
          %v766 = vld [vmem:[#allocation3] sm:$0xff]
          %v767 = vld [vmem:[#allocation3 + $0x8] sm:$0xff]
          %769 = vrot.lane.b32.xlu0 %v767, 127
          %v770 = vpop.permute.xlu0 %769
          %772 = vxpose.xlu0.b32.start [1/16] %v770, 128
          %773 = vxpose.xlu0.b32.cont [2/16] 0.0, 128
          %774 = vxpose.xlu0.b32.cont [3/16] 0.0, 128
          %775 = vxpose.xlu0.b32.cont [4/16] 0.0, 128
          %776 = vxpose.xlu0.b32.cont [5/16] 0.0, 128
          %777 = vxpose.xlu0.b32.cont [6/16] 0.0, 128
          %778 = vxpose.xlu0.b32.cont [7/16] 0.0, 128
          %779 = vxpose.xlu0.b32.cont [8/16] 0.0, 128
          %780 = vxpose.xlu0.b32.cont [9/16] 0.0, 128
          %781 = vxpose.xlu0.b32.cont [10/16] 0.0, 128
          %782 = vxpose.xlu0.b32.cont [11/16] 0.0, 128
          %783 = vxpose.xlu0.b32.cont [12/16] 0.0, 128
          %784 = vxpose.xlu0.b32.cont [13/16] 0.0, 128
          %785 = vxpose.xlu0.b32.cont [14/16] 0.0, 128
          %786 = vxpose.xlu0.b32.cont [15/16] 0.0, 128
          %787 = vxpose.xlu0.b32.end [16/16] 0.0, 128
          %v788 = vpop.trf.xlu0
          %v789 = vpop.trf.xlu0
          %v790 = vpop.trf.xlu0
          %v791 = vpop.trf.xlu0
          %v792 = vpop.trf.xlu0
          %v793 = vpop.trf.xlu0
          %v794 = vpop.trf.xlu0
          %v795 = vpop.trf.xlu0
          %v796 = vpop.trf.xlu0
          %v797 = vpop.trf.xlu0
          %v798 = vpop.trf.xlu0
          %v799 = vpop.trf.xlu0
          %v800 = vpop.trf.xlu0
          %v801 = vpop.trf.xlu0
          %v802 = vpop.trf.xlu0
          %v803 = vpop.trf.xlu0
          %v804 = vpack.c.bf16 %v766, %v766
          %806 = vset.pattern.permute.xlu0 0
          %807 = vperm.xlu0 %806, %v765
          %v808 = vpop.permute.xlu0 %807
          %v810 = vlaneseq
          %v811 = vshrl.u32 %v810, 7
          %v812 = vsub.s32 0, %v811
          %v813 = vrot.slane %v788, %v812
          %v814 = vadd.f32 %v808, %v813
          %v815 = vmul.f32 %v814, 0.2
          %v816 = vmax.f32 %v814, %v815
          %v817 = vsel %vm258, 65537, 0
          %v818 = vunpack.c.l.b16 %v817
          %vm819 = vcmp.ne.s32.totalorder %v818, 0
          %v820 = vsel %vm819, -1e+09, %v816
          %vm821 = vcmask 64512
          %v822 = vsel %vm821, %v820, -inf
          %823 = vmax.xlane.f32.xlu0 %v822
          %v824 = vpop.xlane.xlu0 %823
          %v825 = vsub.f32 %v820, %v824
          %v826 = vmul.f32 %v825, 1.442695
          %v827 = vpow.pop %v826
          %v828 = vsel %vm821, %v827, 0.0
          %829 = vadd.xlane.f32.xlu0 %v828
          %v830 = vpop.xlane.xlu0 %829
          %v831 = vrcp.pop %v830
          %v832 = vmul.f32 %v827, %v831
          %v833 = vpack.c.bf16 %v832, %v832
          %v835 = vsel %vm821, %v833, 0
          %vm837 = vcmask 1043456
          %v839 = vsel %vm837, %v804, 0
          %841 = vmatprep.subr.bf16.mxu0 0
          %842 = vmatpush1.bf16.msra.mxu0 %v839
          %843 = vmatprep.subr.bf16.mxu0 0
          %844 = vmatpush1.bf16.msra.mxu0 0
          %845 = vmatprep.subr.bf16.mxu0 0
          %846 = vmatpush1.bf16.msra.mxu0 0
          %847 = vmatprep.subr.bf16.mxu0 0
          %848 = vmatpush1.bf16.msra.mxu0 0
          %849 = vmatprep.subr.bf16.mxu0 0
          %850 = vmatpush1.bf16.msra.mxu0 0
          %851 = vmatprep.subr.bf16.mxu0 0
          %852 = vmatpush1.bf16.msra.mxu0 0
          %853 = vmatprep.subr.bf16.mxu0 0
          %854 = vmatpush1.bf16.msra.mxu0 0
          %855 = vmatprep.subr.bf16.mxu0 0
          %856 = vmatpush1.bf16.msra.mxu0 0
          %857 = vmatprep.subr.bf16.mxu0 0
          %858 = vmatpush1.bf16.msra.mxu0 0
          %859 = vmatprep.subr.bf16.mxu0 0
          %860 = vmatpush1.bf16.msra.mxu0 0
          %861 = vmatprep.subr.bf16.mxu0 0
          %862 = vmatpush1.bf16.msra.mxu0 0
          %863 = vmatprep.subr.bf16.mxu0 0
          %864 = vmatpush1.bf16.msra.mxu0 0
          %865 = vmatprep.subr.bf16.mxu0 0
          %866 = vmatpush1.bf16.msra.mxu0 0
          %867 = vmatprep.subr.bf16.mxu0 0
          %868 = vmatpush1.bf16.msra.mxu0 0
          %869 = vmatprep.subr.bf16.mxu0 0
          %870 = vmatpush1.bf16.msra.mxu0 0
          %871 = vmatprep.subr.bf16.mxu0 0
          %872 = vmatpush1.bf16.msra.mxu0 0
          %873 = vmatprep.mubr.bf16.mxu0 0
          %874 = vmatmul.mubr.bf16.gmra.mrb[0].mxu0 %v835
          %v875 = vpop.f32.mrb[0].mxu0
          %v876 = vadd.f32 0.0, %v875
          %v877 = vpop.f32.mrb[0].mxu0
          %v878 = vpop.f32.mrb[0].mxu0
          %v879 = vpop.f32.mrb[0].mxu0
          %880 = vdwg.mxu0
          %v881 = vunpack.c.l.bf16 %v257
          %v882 = vsel %vm821, %v881, 0.0
          %883 = vadd.xlane.f32.xlu0 %v882
          %v884 = vpop.xlane.xlu0 %883
          %vm885 = vcmp.eq.f32.partialorder %v884, 0.0
          %v886 = vsel %vm885, 1, 0
          %vm887 = vcmp.eq.s32.totalorder %v886, 1
          %v888 = vsel %vm887, 0.0, %v876
          %889 = vst [vmem:[%s251] sm:$0xff] %v888
        $region64: #{tpu_custom_call.1} parent=35 // pred_fallthru
          _
        %s890 = sand.u32 %s132, 1
        %s891 = scalar_lea.sflag [#allocation6], %s890
        %s892 = sand.u32 %s132, 1
        %s893 = smul.addr %s892, 8
        %s894 = scalar_lea.vmem [#allocation12], %s893
        // Predicated region
        $region65: #{tpu_custom_call.1} parent=35 // pred_check
          %p895 = pneg %p142
        $region66: #{tpu_custom_call.1} parent=35 // pred_check_branch
          %897 = sbr.rel (%p895) target = $region68
        $region67: #{tpu_custom_call.1} parent=35 // pred_region
          %s898 = smul.u32 %s26, %s25
          %s900 = ssub.s32 128, 128
          %901 = vsyncadd %s891, %s900
          %s902 = smul.addr %s898, 128
          %s903 = scalar_lea.hbm %s4, %s902
          %s905 = sshll.u32 %s894, 4
          %s906 = int_to_ptr.vmem [resolvable:$true] %s905
          %908 = dma.vmem_to_hbm [thread:$0]  %s906, 128, %s903, %s891
        $region68: #{tpu_custom_call.1} parent=35 // pred_fallthru
          _
      $region36: #{tpu_custom_call.1} parent=5 // pred_fallthru
        _
      %p909 = scmp.le.s32.totalorder 2, %s16
      // Predicated region
      $region69: #{tpu_custom_call.1} parent=5 // pred_check
        %p910 = pneg %p909
      $region70: #{tpu_custom_call.1} parent=5 // pred_check_branch
        %912 = sbr.rel (%p910) target = $region72
      $region71: #{tpu_custom_call.1} parent=5 // pred_region
        %s913 = ssub.s32 %s16, 2
        // Predicated region
        $region73: #{tpu_custom_call.1} parent=71 // pred_check
          %p914 = pneg %p148
        $region74: #{tpu_custom_call.1} parent=71 // pred_check_branch
          %916 = sbr.rel (%p914) target = $region76
        $region75: #{tpu_custom_call.1} parent=71 // pred_region
          %s917 = sand.u32 %s133, 1
          %s918 = scalar_lea.sflag [#allocation6], %s917
          %s919 = sand.u32 %s133, 1
          %s920 = smul.addr %s919, 8
          %s921 = scalar_lea.vmem [#allocation12], %s920
          %922 = dma.done %s918, 128
        $region76: #{tpu_custom_call.1} parent=71 // pred_fallthru
          _
      $region72: #{tpu_custom_call.1} parent=5 // pred_fallthru
        _
    $region6: #{tpu_custom_call.1} parent=1 // loop_footer
      %s20 = sadd.s32 1, %s16
    $region7: #{tpu_custom_call.1} parent=1 // loop_footer_branch
      %15 = sbr.rel target = $region3
    $region8: #{tpu_custom_call.1} parent=1 // loop_exit
      _
    %923 = vsyncpa [#allocation5], 1
    %s924 = scalar_lea.sflag [#allocation5], 1
    %925 = vsyncpa %s924, 1
    %926 = vsyncpa [#allocation8], 1
    %927 = vsyncpa [#allocation11], 1
    %928 = vsyncpa [#allocation6], 1
    %s929 = scalar_lea.sflag [#allocation6], 1
    %930 = vsyncpa %s929, 1

</llo_original>
